<compile_context>
chip_gen: v7x
topology: tpu7x:2x2x1
jax: 0.10.0
libtpu: 0.0.40
codegen_flags: <defaults>
</compile_context>

<pallas_src>
import functools

import jax
import jax.numpy as jnp
from jax.experimental import pallas as pl
from jax.experimental.pallas import tpu as pltpu

_SUBLANE = 8  # f32 sublane multiple; input/output refs are f32


def _round_up(n, m):
    return ((n + m - 1) // m) * m


def _choose_tile_b(batch, tile_b_max):
    """Batch-tile pick: one un-tiled step for tiny batches, otherwise >=2 large steps."""
    b = _round_up(batch, _SUBLANE)
    if b <= 128:
        # Latency regime: a single grid step; splitting only adds step overhead.
        return b
    # Guarantee >= 2 grid steps (v7x has 2 TensorCores to shard the "parallel"
    # axis across) while keeping tiles as large as possible to amortize the
    # ~0.35us/step pipeline overhead and per-layer MXU fill/drain.
    half = _round_up(pl.cdiv(b, 2), _SUBLANE)
    return min(tile_b_max, half)


def _mlp_kernel(n_layers, x_ref, *refs):
    """Fused MLP on one batch tile.

    x_ref : f32 (tile_b, in_dim)  -- cast to bf16 in-kernel (hidden under input DMA)
    refs  : (W0, b0, W1, b1, ..., W{n-1}, b{n-1}, out_ref)
      W*  : bf16 full weight matrix (constant index_map -> resident across grid steps)
      b*  : f32 (1, fan_out), broadcasts over the batch tile
      out : f32 (tile_b, num_actions) -- narrow, real-data-only store
    """
    wb_refs = refs[:2 * n_layers]
    out_ref = refs[-1]

    h = x_ref[...].astype(jnp.bfloat16)                  # VPU cast, f32 stays in HBM
    for li in range(n_layers):
        w = wb_refs[2 * li][...]                         # bf16
        b = wb_refs[2 * li + 1][...]                     # f32 (1, fan_out)
        y = jnp.dot(h, w, preferred_element_type=jnp.float32) + b
        if li < n_layers - 1:                            # no final activation (q_head)
            h = jnp.maximum(y, 0.0).astype(jnp.bfloat16)
        else:
            h = y                                        # f32
    out_ref[...] = h.astype(out_ref.dtype)


def prepare_params(params):
    """One-time weight prep, hoisted out of the per-call forward path.

    Cast weights to bf16 (MXU inputs) and biases to f32 (1, fan_out). Cache the
    result across env steps so forward() emits no per-call convert/pad XLA ops.
    """
    prepped = []
    for W, b in params:
        prepped.append((jnp.asarray(W, jnp.bfloat16),
                        jnp.asarray(b, jnp.float32).reshape(1, -1)))
    return tuple(prepped)


@functools.partial(jax.jit, static_argnames=("tile_b_max",))
def q_head_forward(x, prepared, *, tile_b_max=2048):
    """Q-head MLP forward, tiled over the batch dimension.

    Numerics: bf16 matmul inputs, f32 accumulation / bias / ReLU / output
    (documented precision contract vs. the f32 PyTorch reference).
    """
    B, in_dim = x.shape
    n_layers = len(prepared)
    out_dim = prepared[-1][0].shape[1]   # num_actions

    tile_b = _choose_tile_b(B, tile_b_max)
    grid = (pl.cdiv(B, tile_b),)

    flat_args = []
    in_specs = [pl.BlockSpec((tile_b, in_dim), lambda i: (i, 0))]
    for W, b in prepared:
        flat_args += [W, b]
        # Constant index_maps -> weights/biases stay resident in VMEM across steps.
        in_specs.append(pl.BlockSpec(W.shape, lambda i: (0, 0)))
        in_specs.append(pl.BlockSpec(b.shape, lambda i: (0, 0)))

    # Narrow output: block last dim == full array dim (num_actions), so this is
    # legal and avoids the old 128-lane zero-padded writeback + trailing slice.
    out_specs = pl.BlockSpec((tile_b, out_dim), lambda i: (i, 0))

    kernel = functools.partial(_mlp_kernel, n_layers)
    q_vals = pl.pallas_call(
        kernel,
        out_shape=jax.ShapeDtypeStruct((B, out_dim), jnp.float32),
        grid=grid,
        in_specs=in_specs,
        out_specs=out_specs,
        compiler_params=pltpu.CompilerParams(dimension_semantics=("parallel",)),
    )(x, *flat_args)

    # forward(): q_vals.view(-1, num_actions) -- already exactly that shape.
    return q_vals


def init_mlp_params(key, in_dim, hidden_dims, out_dim):
    """Deterministic PyTorch-style init: U(-1/sqrt(fan_in), 1/sqrt(fan_in))."""
    dims = [in_dim] + list(hidden_dims) + [out_dim]
    params = []
    for i in range(len(dims) - 1):
        key, kw, kb = jax.random.split(key, 3)
        fan_in, fan_out = dims[i], dims[i + 1]
        bound = 1.0 / jnp.sqrt(fan_in)
        W = jax.random.uniform(kw, (fan_in, fan_out), jnp.float32, -bound, bound)
        b = jax.random.uniform(kb, (fan_out,), jnp.float32, -bound, bound)
        params.append((W, b))
    return params


def q_head_reference_f32(x, params):
    h = x
    for i, (W, b) in enumerate(params):
        h = h @ W + b
        if i < len(params) - 1:
            h = jnp.maximum(h, 0.0)
    return h.reshape(-1, params[-1][0].shape[1])


def q_head_reference_bf16(x, params):
    """Pure-JAX reference matching the kernel's bf16-input / f32-accumulate numerics."""
    h = x.astype(jnp.bfloat16)
    for i, (W, b) in enumerate(params):
        y = jnp.dot(h, W.astype(jnp.bfloat16), preferred_element_type=jnp.float32)
        y = y + b.astype(jnp.float32)
        if i < len(params) - 1:
            h = jnp.maximum(y, 0.0).astype(jnp.bfloat16)
        else:
            h = y
    return h.reshape(-1, params[-1][0].shape[1])


if __name__ == "__main__":
    # Small shapes consistent with the module: in_dim=32, hidden_dims=[64, 32],
    # out_dim (num_actions) = 4.
    key = jax.random.PRNGKey(0)
    k_x, k_p, k_x2, k_x3 = jax.random.split(key, 4)

    B, in_dim = 16, 32
    hidden_dims = [64, 32]
    out_dim = 4  # num_actions

    x = jax.random.normal(k_x, (B, in_dim), dtype=jnp.float32)
    params = init_mlp_params(k_p, in_dim, hidden_dims, out_dim)
    prepared = prepare_params(params)  # one-time, cached across forward() calls

    # Tiny-batch / latency path: single un-tiled grid step.
    q_vals = jax.block_until_ready(q_head_forward(x, prepared))
    assert q_vals.shape == (B, out_dim)
    assert jnp.allclose(q_vals, q_head_reference_bf16(x, params), atol=1e-3, rtol=1e-3)
    assert jnp.allclose(q_vals, q_head_reference_f32(x, params), atol=5e-2, rtol=5e-2)

    # Ragged mid-size batch: 2 parallel grid steps + partial trailing block
    # (no wrapper-side padding; OOB rows are masked on write).
    B2 = 600
    x2 = jax.random.normal(k_x2, (B2, in_dim), dtype=jnp.float32)
    q2 = jax.block_until_ready(q_head_forward(x2, prepared))
    assert q2.shape == (B2, out_dim)
    assert jnp.allclose(q2, q_head_reference_bf16(x2, params), atol=1e-3, rtol=1e-3)

    # Large-batch throughput path: exercises the 2048-row tile (2 steps).
    B3 = 4096
    x3 = jax.random.normal(k_x3, (B3, in_dim), dtype=jnp.float32)
    q3 = jax.block_until_ready(q_head_forward(x3, prepared))
    assert q3.shape == (B3, out_dim)
    assert jnp.allclose(q3, q_head_reference_bf16(x3, params), atol=1e-3, rtol=1e-3)

    # TODO(synk): predict()/train_step() (Adam, HuberLoss, grad clipping) are
    # training-side utilities, not part of the forward hot path; not kernels.
    print("KERNEL_OK")
</pallas_src>

<mosaic_0001>
module attributes {stable_mosaic.version = 11 : i64} {
  func.func @_mlp_kernel(%arg0: i32, %arg1: memref<16x32xf32, #tpu.memory_space<vmem>>, %arg2: memref<32x64xbf16, #tpu.memory_space<vmem>>, %arg3: memref<1x64xf32, #tpu.memory_space<vmem>>, %arg4: memref<64x32xbf16, #tpu.memory_space<vmem>>, %arg5: memref<1x32xf32, #tpu.memory_space<vmem>>, %arg6: memref<32x4xbf16, #tpu.memory_space<vmem>>, %arg7: memref<1x4xf32, #tpu.memory_space<vmem>>, %arg8: memref<16x4xf32, #tpu.memory_space<vmem>>) attributes {dimension_semantics = [#tpu.dimension_semantics<parallel>], iteration_bounds = array<i64: 1>, scalar_prefetch = 0 : i64, scratch_operands = 0 : i64, tpu.core_type = #tpu.core_type<tc>, window_params = [{transform_indices = @transform_0, window_bounds = array<i64: 16, 32>}, {pipeline_mode = #tpu.pipeline_mode<synchronous>, transform_indices = @transform_1, window_bounds = array<i64: 32, 64>}, {pipeline_mode = #tpu.pipeline_mode<synchronous>, transform_indices = @transform_2, window_bounds = array<i64: 1, 64>}, {pipeline_mode = #tpu.pipeline_mode<synchronous>, transform_indices = @transform_3, window_bounds = array<i64: 64, 32>}, {pipeline_mode = #tpu.pipeline_mode<synchronous>, transform_indices = @transform_4, window_bounds = array<i64: 1, 32>}, {pipeline_mode = #tpu.pipeline_mode<synchronous>, transform_indices = @transform_5, window_bounds = array<i64: 32, 4>}, {pipeline_mode = #tpu.pipeline_mode<synchronous>, transform_indices = @transform_6, window_bounds = array<i64: 1, 4>}, {transform_indices = @transform_7, window_bounds = array<i64: 16, 4>}]} {
    %c0 = arith.constant 0 : index
    %c0_0 = arith.constant 0 : index
    %0 = vector.load %arg1[%c0, %c0_0] : memref<16x32xf32, #tpu.memory_space<vmem>>, vector<16x32xf32>
    %1 = arith.truncf %0 : vector<16x32xf32> to vector<16x32xbf16>
    %c0_1 = arith.constant 0 : index
    %c0_2 = arith.constant 0 : index
    %2 = vector.load %arg2[%c0_1, %c0_2] : memref<32x64xbf16, #tpu.memory_space<vmem>>, vector<32x64xbf16>
    %c0_3 = arith.constant 0 : index
    %c0_4 = arith.constant 0 : index
    %3 = vector.load %arg3[%c0_3, %c0_4] : memref<1x64xf32, #tpu.memory_space<vmem>>, vector<1x64xf32>
    %cst = arith.constant dense<0.000000e+00> : vector<16x64xf32>
    %4 = tpu.matmul %1, %2, %cst {dimension_numbers = #tpu.dot_dimension_numbers<[1], [0], [0], [1], [0, 0, 1, 1], [], []>} : vector<16x32xbf16>, vector<32x64xbf16>, vector<16x64xf32> -> vector<16x64xf32>
    %5 = vector.broadcast %3 : vector<1x64xf32> to vector<16x64xf32>
    %6 = arith.addf %4, %5 : vector<16x64xf32>
    %cst_5 = arith.constant 0.000000e+00 : f32
    %7 = vector.broadcast %cst_5 : f32 to vector<16x64xf32>
    %8 = arith.maximumf %6, %7 : vector<16x64xf32>
    %9 = arith.truncf %8 : vector<16x64xf32> to vector<16x64xbf16>
    %c0_6 = arith.constant 0 : index
    %c0_7 = arith.constant 0 : index
    %10 = vector.load %arg4[%c0_6, %c0_7] : memref<64x32xbf16, #tpu.memory_space<vmem>>, vector<64x32xbf16>
    %c0_8 = arith.constant 0 : index
    %c0_9 = arith.constant 0 : index
    %11 = vector.load %arg5[%c0_8, %c0_9] : memref<1x32xf32, #tpu.memory_space<vmem>>, vector<1x32xf32>
    %cst_10 = arith.constant dense<0.000000e+00> : vector<16x32xf32>
    %12 = tpu.matmul %9, %10, %cst_10 {dimension_numbers = #tpu.dot_dimension_numbers<[1], [0], [0], [1], [0, 0, 1, 1], [], []>} : vector<16x64xbf16>, vector<64x32xbf16>, vector<16x32xf32> -> vector<16x32xf32>
    %13 = vector.broadcast %11 : vector<1x32xf32> to vector<16x32xf32>
    %14 = arith.addf %12, %13 : vector<16x32xf32>
    %cst_11 = arith.constant 0.000000e+00 : f32
    %15 = vector.broadcast %cst_11 : f32 to vector<16x32xf32>
    %16 = arith.maximumf %14, %15 : vector<16x32xf32>
    %17 = arith.truncf %16 : vector<16x32xf32> to vector<16x32xbf16>
    %c0_12 = arith.constant 0 : index
    %c0_13 = arith.constant 0 : index
    %18 = vector.load %arg6[%c0_12, %c0_13] : memref<32x4xbf16, #tpu.memory_space<vmem>>, vector<32x4xbf16>
    %c0_14 = arith.constant 0 : index
    %c0_15 = arith.constant 0 : index
    %19 = vector.load %arg7[%c0_14, %c0_15] : memref<1x4xf32, #tpu.memory_space<vmem>>, vector<1x4xf32>
    %cst_16 = arith.constant dense<0.000000e+00> : vector<16x4xf32>
    %20 = tpu.matmul %17, %18, %cst_16 {dimension_numbers = #tpu.dot_dimension_numbers<[1], [0], [0], [1], [0, 0, 1, 1], [], []>} : vector<16x32xbf16>, vector<32x4xbf16>, vector<16x4xf32> -> vector<16x4xf32>
    %21 = vector.broadcast %19 : vector<1x4xf32> to vector<16x4xf32>
    %22 = arith.addf %20, %21 : vector<16x4xf32>
    %c0_17 = arith.constant 0 : index
    %c0_18 = arith.constant 0 : index
    %23 = vector.load %arg8[%c0_17, %c0_18] : memref<16x4xf32, #tpu.memory_space<vmem>>, vector<16x4xf32>
    tpu.vector_store %arg8[%c0_17, %c0_18], %22 {strides = array<i32>} : memref<16x4xf32, #tpu.memory_space<vmem>>, vector<16x4xf32>,
    return
  }
  func.func @transform_0(%arg0: i32) -> (i32, i32) {
    %c0_i32 = arith.constant 0 : i32
    %c0_i32_0 = arith.constant 0 : i32
    return %arg0, %c0_i32 : i32, i32
  }
  func.func @transform_1(%arg0: i32) -> (i32, i32) {
    %c0_i32 = arith.constant 0 : i32
    %c0_i32_0 = arith.constant 0 : i32
    %c0_i32_1 = arith.constant 0 : i32
    return %c0_i32, %c0_i32_0 : i32, i32
  }
  func.func @transform_2(%arg0: i32) -> (i32, i32) {
    %c0_i32 = arith.constant 0 : i32
    %c0_i32_0 = arith.constant 0 : i32
    %c0_i32_1 = arith.constant 0 : i32
    return %c0_i32, %c0_i32_0 : i32, i32
  }
  func.func @transform_3(%arg0: i32) -> (i32, i32) {
    %c0_i32 = arith.constant 0 : i32
    %c0_i32_0 = arith.constant 0 : i32
    %c0_i32_1 = arith.constant 0 : i32
    return %c0_i32, %c0_i32_0 : i32, i32
  }
  func.func @transform_4(%arg0: i32) -> (i32, i32) {
    %c0_i32 = arith.constant 0 : i32
    %c0_i32_0 = arith.constant 0 : i32
    %c0_i32_1 = arith.constant 0 : i32
    return %c0_i32, %c0_i32_0 : i32, i32
  }
  func.func @transform_5(%arg0: i32) -> (i32, i32) {
    %c0_i32 = arith.constant 0 : i32
    %c0_i32_0 = arith.constant 0 : i32
    %c0_i32_1 = arith.constant 0 : i32
    return %c0_i32, %c0_i32_0 : i32, i32
  }
  func.func @transform_6(%arg0: i32) -> (i32, i32) {
    %c0_i32 = arith.constant 0 : i32
    %c0_i32_0 = arith.constant 0 : i32
    %c0_i32_1 = arith.constant 0 : i32
    return %c0_i32, %c0_i32_0 : i32, i32
  }
  func.func @transform_7(%arg0: i32) -> (i32, i32) {
    %c0_i32 = arith.constant 0 : i32
    %c0_i32_0 = arith.constant 0 : i32
    return %arg0, %c0_i32 : i32, i32
  }
}

</mosaic_0001>

<llo_original>
// kernel: q_head_forward.1
$region0: #{q_head_forward.1}
  #allocation0 [shape = 'u32[]', space=smem, size = 0x4, offset = 0x4, fixed_abs, tag = 'smem constant byte address 0x4 - core index']
  #allocation1 [shape = 'u32[144,128]{1,0:T(1,128)}', space=vmem, size = 0x12000, scoped, tag = 'internal scratch']
  %s0 = inlined_call_operand.vmem [shape: f32[16,32], index: 0, kind: input, shape index: {}]
  %s1 = inlined_call_operand.vmem [shape: bf16[32,64], index: 1, kind: input, shape index: {}]
  %s2 = inlined_call_operand.vmem [shape: f32[1,64], index: 2, kind: input, shape index: {}]
  %s3 = inlined_call_operand.vmem [shape: bf16[64,32], index: 3, kind: input, shape index: {}]
  %s4 = inlined_call_operand.vmem [shape: f32[1,32], index: 4, kind: input, shape index: {}]
  %s5 = inlined_call_operand.vmem [shape: bf16[32,4], index: 5, kind: input, shape index: {}]
  %s6 = inlined_call_operand.vmem [shape: f32[1,4], index: 6, kind: input, shape index: {}]
  %s7 = inlined_call_operand.vmem [shape: f32[16,4], index: 7, kind: output, shape index: {}]
  %s8 = sld [smem:[#allocation0]]
  $region38: #{q_head_forward.1} parent=0
    _
  %s10 = ssub.s32 1, %s8
  %s11 = scalar_select 0, %s10, %s8
  // Predicated region
  $region2: #{q_head_forward.1} parent=0 // pred_check
    _
  $region3: #{q_head_forward.1} parent=0 // pred_check_branch
    %13 = sbr.rel (0) target = $region5
  $region4: #{q_head_forward.1} parent=0 // pred_region
    _
  $region5: #{q_head_forward.1} parent=0 // pred_fallthru
    _
  // Predicated region
  $region6: #{q_head_forward.1} parent=0 // pred_check
    _
  $region7: #{q_head_forward.1} parent=0 // pred_check_branch
    %15 = sbr.rel (0) target = $region9
  $region8: #{q_head_forward.1} parent=0 // pred_region
    _
  $region9: #{q_head_forward.1} parent=0 // pred_fallthru
    _
  // Predicated region
  $region10: #{q_head_forward.1} parent=0 // pred_check
    _
  $region11: #{q_head_forward.1} parent=0 // pred_check_branch
    %17 = sbr.rel (0) target = $region13
  $region12: #{q_head_forward.1} parent=0 // pred_region
    _
  $region13: #{q_head_forward.1} parent=0 // pred_fallthru
    _
  // Predicated region
  $region14: #{q_head_forward.1} parent=0 // pred_check
    _
  $region15: #{q_head_forward.1} parent=0 // pred_check_branch
    %19 = sbr.rel (0) target = $region17
  $region16: #{q_head_forward.1} parent=0 // pred_region
    _
  $region17: #{q_head_forward.1} parent=0 // pred_fallthru
    _
  // Predicated region
  $region18: #{q_head_forward.1} parent=0 // pred_check
    _
  $region19: #{q_head_forward.1} parent=0 // pred_check_branch
    %21 = sbr.rel (0) target = $region21
  $region20: #{q_head_forward.1} parent=0 // pred_region
    _
  $region21: #{q_head_forward.1} parent=0 // pred_fallthru
    _
  // Predicated region
  $region22: #{q_head_forward.1} parent=0 // pred_check
    _
  $region23: #{q_head_forward.1} parent=0 // pred_check_branch
    %23 = sbr.rel (0) target = $region25
  $region24: #{q_head_forward.1} parent=0 // pred_region
    _
  $region25: #{q_head_forward.1} parent=0 // pred_fallthru
    _
  // Predicated region
  $region26: #{q_head_forward.1} parent=0 // pred_check
    _
  $region27: #{q_head_forward.1} parent=0 // pred_check_branch
    %25 = sbr.rel (0) target = $region29
  $region28: #{q_head_forward.1} parent=0 // pred_region
    _
  $region29: #{q_head_forward.1} parent=0 // pred_fallthru
    _
  %v27 = vld [vmem:[%s0] sm:$0xff]
  %v28 = vld [vmem:[%s0 + $0x8] sm:$0xff]
  %v29 = vpack.c.bf16 %v28, %v27
  %v30 = vld [vmem:[%s1] sm:$0xf]
  %v31 = vld [vmem:[%s1 + $0x4] sm:$0xf]
  %v32 = vld [vmem:[%s1 + $0x8] sm:$0xf]
  %v33 = vld [vmem:[%s1 + $0xc] sm:$0xf]
  %v34 = vld [vmem:[%s2] sm:$0x1]
  %v36 = vlaneseq
  %v37 = vshrl.u32 %v36, 7
  %v38 = vsub.s32 0, %v37
  %v39 = vrot.slane %v34, %v38
  %v45 = vunpack.c.l.b16 %v30
  %v46 = vunpack.c.l.b16 %v31
  %v47 = vunpack.c.l.b16 %v32
  %v48 = vunpack.c.l.b16 %v33
  %v49 = vpack.c.b16 %v46, %v45
  %v50 = vpack.c.b16 %v48, %v47
  %vm53 = vcmask 261120
  %v55 = vsel %vm53, %v29, 0
  %57 = vmatprep.subr.bf16.mxu0 0
  %58 = vmatpush1.bf16.msra.mxu0 %v49
  %59 = vmatprep.subr.bf16.mxu0 0
  %60 = vmatpush1.bf16.msra.mxu0 %v50
  %61 = vmatprep.subr.bf16.mxu0 0
  %62 = vmatpush1.bf16.msra.mxu0 0
  %63 = vmatprep.subr.bf16.mxu0 0
  %64 = vmatpush1.bf16.msra.mxu0 0
  %65 = vmatprep.subr.bf16.mxu0 0
  %66 = vmatpush1.bf16.msra.mxu0 0
  %67 = vmatprep.subr.bf16.mxu0 0
  %68 = vmatpush1.bf16.msra.mxu0 0
  %69 = vmatprep.subr.bf16.mxu0 0
  %70 = vmatpush1.bf16.msra.mxu0 0
  %71 = vmatprep.subr.bf16.mxu0 0
  %72 = vmatpush1.bf16.msra.mxu0 0
  %73 = vmatprep.subr.bf16.mxu0 0
  %74 = vmatpush1.bf16.msra.mxu0 0
  %75 = vmatprep.subr.bf16.mxu0 0
  %76 = vmatpush1.bf16.msra.mxu0 0
  %77 = vmatprep.subr.bf16.mxu0 0
  %78 = vmatpush1.bf16.msra.mxu0 0
  %79 = vmatprep.subr.bf16.mxu0 0
  %80 = vmatpush1.bf16.msra.mxu0 0
  %81 = vmatprep.subr.bf16.mxu0 0
  %82 = vmatpush1.bf16.msra.mxu0 0
  %83 = vmatprep.subr.bf16.mxu0 0
  %84 = vmatpush1.bf16.msra.mxu0 0
  %85 = vmatprep.subr.bf16.mxu0 0
  %86 = vmatpush1.bf16.msra.mxu0 0
  %87 = vmatprep.subr.bf16.mxu0 0
  %88 = vmatpush1.bf16.msra.mxu0 0
  %89 = vmatprep.mubr.bf16.mxu0 0
  %90 = vmatmul.mubr.bf16.gmra.mrb[0].mxu0 %v55
  %v91 = vpop.f32.mrb[0].mxu0
  %v92 = vadd.f32 %v39, %v91
  %v93 = vpop.f32.mrb[0].mxu0
  %v94 = vpop.f32.mrb[0].mxu0
  %v95 = vadd.f32 %v39, %v94
  %v96 = vpop.f32.mrb[0].mxu0
  %97 = vdwg.mxu0
  %v98 = vmax.f32 %v92, 0.0
  %v99 = vmax.f32 %v95, 0.0
  %v100 = vpack.c.bf16 %v99, %v98
  %v101 = vld [vmem:[%s3] sm:$0xf]
  %v102 = vld [vmem:[%s3 + $0x4] sm:$0xf]
  %v103 = vld [vmem:[%s3 + $0x8] sm:$0xf]
  %v104 = vld [vmem:[%s3 + $0xc] sm:$0xf]
  %v105 = vld [vmem:[%s3 + $0x10] sm:$0xf]
  %v106 = vld [vmem:[%s3 + $0x14] sm:$0xf]
  %v107 = vld [vmem:[%s3 + $0x18] sm:$0xf]
  %v108 = vld [vmem:[%s3 + $0x1c] sm:$0xf]
  %v109 = vld [vmem:[%s4] sm:$0x1]
  %v111 = vlaneseq
  %v112 = vshrl.u32 %v111, 7
  %v113 = vsub.s32 0, %v112
  %v114 = vrot.slane %v109, %v113
  %v124 = vunpack.c.l.b16 %v101
  %v125 = vunpack.c.l.b16 %v102
  %v126 = vunpack.c.l.b16 %v103
  %v127 = vunpack.c.l.b16 %v104
  %v128 = vunpack.c.l.b16 %v105
  %v129 = vunpack.c.l.b16 %v106
  %v130 = vunpack.c.l.b16 %v107
  %v131 = vunpack.c.l.b16 %v108
  %v132 = vpack.c.b16 %v125, %v124
  %v133 = vpack.c.b16 %v127, %v126
  %v134 = vpack.c.b16 %v129, %v128
  %v135 = vpack.c.b16 %v131, %v130
  %vm140 = vcmask 523264
  %v142 = vsel %vm140, %v100, 0
  %144 = vmatprep.subr.bf16.mxu0 0
  %145 = vmatpush1.bf16.msra.mxu0 %v132
  %146 = vmatprep.subr.bf16.mxu0 0
  %147 = vmatpush1.bf16.msra.mxu0 %v133
  %148 = vmatprep.subr.bf16.mxu0 0
  %149 = vmatpush1.bf16.msra.mxu0 %v134
  %150 = vmatprep.subr.bf16.mxu0 0
  %151 = vmatpush1.bf16.msra.mxu0 %v135
  %152 = vmatprep.subr.bf16.mxu0 0
  %153 = vmatpush1.bf16.msra.mxu0 0
  %154 = vmatprep.subr.bf16.mxu0 0
  %155 = vmatpush1.bf16.msra.mxu0 0
  %156 = vmatprep.subr.bf16.mxu0 0
  %157 = vmatpush1.bf16.msra.mxu0 0
  %158 = vmatprep.subr.bf16.mxu0 0
  %159 = vmatpush1.bf16.msra.mxu0 0
  %160 = vmatprep.subr.bf16.mxu0 0
  %161 = vmatpush1.bf16.msra.mxu0 0
  %162 = vmatprep.subr.bf16.mxu0 0
  %163 = vmatpush1.bf16.msra.mxu0 0
  %164 = vmatprep.subr.bf16.mxu0 0
  %165 = vmatpush1.bf16.msra.mxu0 0
  %166 = vmatprep.subr.bf16.mxu0 0
  %167 = vmatpush1.bf16.msra.mxu0 0
  %168 = vmatprep.subr.bf16.mxu0 0
  %169 = vmatpush1.bf16.msra.mxu0 0
  %170 = vmatprep.subr.bf16.mxu0 0
  %171 = vmatpush1.bf16.msra.mxu0 0
  %172 = vmatprep.subr.bf16.mxu0 0
  %173 = vmatpush1.bf16.msra.mxu0 0
  %174 = vmatprep.subr.bf16.mxu0 0
  %175 = vmatpush1.bf16.msra.mxu0 0
  %176 = vmatprep.mubr.bf16.mxu0 0
  %177 = vmatmul.mubr.bf16.gmra.mrb[0].mxu0 %v142
  %v178 = vpop.f32.mrb[0].mxu0
  %v179 = vadd.f32 %v114, %v178
  %v180 = vpop.f32.mrb[0].mxu0
  %v181 = vpop.f32.mrb[0].mxu0
  %v182 = vadd.f32 %v114, %v181
  %v183 = vpop.f32.mrb[0].mxu0
  %184 = vdwg.mxu0
  %v185 = vmax.f32 %v179, 0.0
  %v186 = vmax.f32 %v182, 0.0
  %v187 = vpack.c.bf16 %v186, %v185
  %v188 = vld [vmem:[%s5] sm:$0xf]
  %v189 = vld [vmem:[%s5 + $0x4] sm:$0xf]
  %v190 = vld [vmem:[%s5 + $0x8] sm:$0xf]
  %v191 = vld [vmem:[%s5 + $0xc] sm:$0xf]
  %v192 = vld [vmem:[%s6] sm:$0x1]
  %v194 = vlaneseq
  %v195 = vshrl.u32 %v194, 7
  %v196 = vsub.s32 0, %v195
  %v197 = vrot.slane %v192, %v196
  %v203 = vunpack.c.l.b16 %v188
  %v204 = vunpack.c.l.b16 %v189
  %v205 = vunpack.c.l.b16 %v190
  %v206 = vunpack.c.l.b16 %v191
  %v207 = vpack.c.b16 %v204, %v203
  %v208 = vpack.c.b16 %v206, %v205
  %v212 = vsel %vm53, %v187, 0
  %214 = vmatprep.subr.bf16.mxu0 0
  %215 = vmatpush1.bf16.msra.mxu0 %v207
  %216 = vmatprep.subr.bf16.mxu0 0
  %217 = vmatpush1.bf16.msra.mxu0 %v208
  %218 = vmatprep.subr.bf16.mxu0 0
  %219 = vmatpush1.bf16.msra.mxu0 0
  %220 = vmatprep.subr.bf16.mxu0 0
  %221 = vmatpush1.bf16.msra.mxu0 0
  %222 = vmatprep.subr.bf16.mxu0 0
  %223 = vmatpush1.bf16.msra.mxu0 0
  %224 = vmatprep.subr.bf16.mxu0 0
  %225 = vmatpush1.bf16.msra.mxu0 0
  %226 = vmatprep.subr.bf16.mxu0 0
  %227 = vmatpush1.bf16.msra.mxu0 0
  %228 = vmatprep.subr.bf16.mxu0 0
  %229 = vmatpush1.bf16.msra.mxu0 0
  %230 = vmatprep.subr.bf16.mxu0 0
  %231 = vmatpush1.bf16.msra.mxu0 0
  %232 = vmatprep.subr.bf16.mxu0 0
  %233 = vmatpush1.bf16.msra.mxu0 0
  %234 = vmatprep.subr.bf16.mxu0 0
  %235 = vmatpush1.bf16.msra.mxu0 0
  %236 = vmatprep.subr.bf16.mxu0 0
  %237 = vmatpush1.bf16.msra.mxu0 0
  %238 = vmatprep.subr.bf16.mxu0 0
  %239 = vmatpush1.bf16.msra.mxu0 0
  %240 = vmatprep.subr.bf16.mxu0 0
  %241 = vmatpush1.bf16.msra.mxu0 0
  %242 = vmatprep.subr.bf16.mxu0 0
  %243 = vmatpush1.bf16.msra.mxu0 0
  %244 = vmatprep.subr.bf16.mxu0 0
  %245 = vmatpush1.bf16.msra.mxu0 0
  %246 = vmatprep.mubr.bf16.mxu0 0
  %247 = vmatmul.mubr.bf16.gmra.mrb[0].mxu0 %v212
  %v248 = vpop.f32.mrb[0].mxu0
  %v249 = vadd.f32 %v197, %v248
  %v250 = vpop.f32.mrb[0].mxu0
  %v251 = vpop.f32.mrb[0].mxu0
  %v252 = vadd.f32 %v197, %v251
  %v253 = vpop.f32.mrb[0].mxu0
  %254 = vdwg.mxu0
  %vm255 = vcmask 31744
  %256 = vst.msk [vmem:[%s7] sm:$0xff] %vm255, %v249
  %257 = vst.msk [vmem:[%s7 + $0x8] sm:$0xff] %vm255, %v252
  // Predicated region
  $region30: #{q_head_forward.1} parent=0 // pred_check
    _
  $region31: #{q_head_forward.1} parent=0 // pred_check_branch
    %259 = sbr.rel (0) target = $region33
  $region32: #{q_head_forward.1} parent=0 // pred_region
    _
  $region33: #{q_head_forward.1} parent=0 // pred_fallthru
    _
  // Predicated region
  $region34: #{q_head_forward.1} parent=0 // pred_check
    _
  $region35: #{q_head_forward.1} parent=0 // pred_check_branch
    %261 = sbr.rel (0) target = $region37
  $region36: #{q_head_forward.1} parent=0 // pred_region
    _
  $region37: #{q_head_forward.1} parent=0 // pred_fallthru
    _

</llo_original>
